<compile_context>
chip_gen: v5e
topology: v5e:2x2
jax: 0.10.0
libtpu: 0.0.40
codegen_flags: <defaults>
</compile_context>

<pallas_src>
import jax
import jax.numpy as jnp
from jax.experimental import pallas as pl
from jax.experimental.pallas import tpu as pltpu

BN_EPS = 1e-5  # PyTorch BatchNorm1d default eps


def encoder_to_dirichlet_kernel(h_ref, w_ref, out_ref):
    """One independent module forward per grid step.

    h_ref:   (1, B, H)   f32 VMEM — one activation block
    w_ref:   (H, T)      f32 VMEM — transposed nn.Linear weight (shared)
    out_ref: (1, B, 2*T) f32 VMEM — lanes [0:T) = alpha, [T:2T) = Dirichlet mean
    """
    # --- Linear (bias-free: BN mean subtraction cancels the bias) on the MXU ---
    x = jnp.dot(h_ref[0], w_ref[...], preferred_element_type=jnp.float32)  # (B, T)

    # --- BatchNorm1d(affine=False), training mode: per-feature batch stats ---
    mu = jnp.mean(x, axis=0, keepdims=True)                 # (1, T)
    xc = x - mu
    var = jnp.mean(xc * xc, axis=0, keepdims=True)          # biased variance
    alpha = jnp.exp(xc * jax.lax.rsqrt(var + BN_EPS))       # concentration > 0

    # --- Fused Dirichlet mean (exact reciprocal => exact simplex rows) ---
    row_sum = jnp.sum(alpha, axis=-1, keepdims=True)        # (B, 1)
    dmean = alpha / row_sum

    # --- Single consolidated output slab: one store, one writeback DMA ---
    out_ref[0] = jnp.concatenate([alpha, dmean], axis=-1)   # (B, 2*T)


def encoder_to_dirichlet(hidden, weight_t, bias=None):
    """hidden: (B, H) or (Nblk, B, H) f32; weight_t: (H, T) f32 (W.T of nn.Linear).

    Each leading block is an independent forward pass of the module (its own
    BatchNorm batch), so batching many small calls into one pallas_call keeps
    the math identical while amortizing dispatch overhead.
    `bias` is accepted for nn.Linear signature parity but intentionally unused:
    the affine=False BN mean subtraction cancels it exactly.
    Returns (alpha, dirichlet_mean) with the same leading shape as `hidden`.
    """
    del bias
    squeeze = hidden.ndim == 2
    if squeeze:
        hidden = hidden[None]
    nblk, b, h = hidden.shape
    t = weight_t.shape[1]

    cost = pl.CostEstimate(
        flops=nblk * (2 * b * h * t + 10 * b * t),      # matmul + BN/normalize
        transcendentals=nblk * (b * t + t),             # exp per elem + rsqrt per feat
        bytes_accessed=4 * (nblk * b * h + h * t + nblk * b * 2 * t),
    )

    out = pl.pallas_call(
        encoder_to_dirichlet_kernel,
        out_shape=jax.ShapeDtypeStruct((nblk, b, 2 * t), jnp.float32),
        grid=(nblk,),
        in_specs=[
            pl.BlockSpec((1, b, h), lambda i: (i, 0, 0)),   # per-block activations
            pl.BlockSpec((h, t), lambda i: (0, 0)),         # shared weight
        ],
        out_specs=pl.BlockSpec((1, b, 2 * t), lambda i: (i, 0, 0)),
        compiler_params=pltpu.CompilerParams(
            dimension_semantics=("parallel",)),             # megacore-shardable
        cost_estimate=cost,
    )(hidden, weight_t)

    alpha = out[..., :t]
    dmean = out[..., t:]
    if squeeze:
        alpha, dmean = alpha[0], dmean[0]
    return alpha, dmean


def _reference(hidden, weight_t, bias):
    """Pure-JAX reference mirroring the PyTorch forward (training-mode BN,
    including the Linear bias — which BN cancels up to fp rounding).
    Works for (B, H) and (Nblk, B, H) inputs (BN stats per leading block)."""
    x = jnp.dot(hidden, weight_t, precision=jax.lax.Precision.HIGHEST) + bias
    mean = jnp.mean(x, axis=-2, keepdims=True)
    var = jnp.mean((x - mean) ** 2, axis=-2, keepdims=True)
    alpha = jnp.exp((x - mean) / jnp.sqrt(var + BN_EPS))
    dmean = alpha / jnp.sum(alpha, axis=-1, keepdims=True)
    return alpha, dmean


if __name__ == "__main__":
    # Module config: hidden_size = (64, 48, 32) -> hidden_size[2] = 32 features.
    hidden_dim = 32
    num_topics = 16
    batch = 8
    n_blocks = 4   # batched path: 4 independent forward passes, one pallas_call

    key = jax.random.PRNGKey(0)
    k_h, k_hb, k_w, k_b = jax.random.split(key, 4)

    # Deterministic synthetic parameters (PyTorch Linear-style uniform init).
    limit = 1.0 / jnp.sqrt(jnp.float32(hidden_dim))
    weight_t = jax.random.uniform(k_w, (hidden_dim, num_topics),
                                  minval=-limit, maxval=limit, dtype=jnp.float32)
    bias = jax.random.uniform(k_b, (num_topics,),
                              minval=-limit, maxval=limit, dtype=jnp.float32)

    # --- single-block path: exactly the module's forward ---
    hidden = jax.random.normal(k_h, (batch, hidden_dim), dtype=jnp.float32)
    alpha, dmean = encoder_to_dirichlet(hidden, weight_t, bias)
    alpha = jax.block_until_ready(alpha)
    dmean = jax.block_until_ready(dmean)
    ref_alpha, ref_mean = _reference(hidden, weight_t, bias)

    assert alpha.shape == (batch, num_topics)
    assert dmean.shape == (batch, num_topics)
    assert bool(jnp.all(alpha > 0.0))
    assert bool(jnp.allclose(alpha, ref_alpha, rtol=5e-3, atol=5e-3))
    assert bool(jnp.allclose(dmean, ref_mean, rtol=5e-3, atol=5e-3))
    # Exact reciprocal -> rows are an exact simplex (up to fp summation).
    assert bool(jnp.allclose(jnp.sum(dmean, axis=-1), 1.0, atol=1e-5))

    # --- batched path: Nblk independent forward passes in one call ---
    hidden_b = jax.random.normal(k_hb, (n_blocks, batch, hidden_dim),
                                 dtype=jnp.float32)
    alpha_b, dmean_b = encoder_to_dirichlet(hidden_b, weight_t, bias)
    alpha_b = jax.block_until_ready(alpha_b)
    dmean_b = jax.block_until_ready(dmean_b)
    ref_alpha_b, ref_mean_b = _reference(hidden_b, weight_t, bias)

    assert alpha_b.shape == (n_blocks, batch, num_topics)
    assert dmean_b.shape == (n_blocks, batch, num_topics)
    assert bool(jnp.all(alpha_b > 0.0))
    assert bool(jnp.allclose(alpha_b, ref_alpha_b, rtol=5e-3, atol=5e-3))
    assert bool(jnp.allclose(dmean_b, ref_mean_b, rtol=5e-3, atol=5e-3))
    assert bool(jnp.allclose(jnp.sum(dmean_b, axis=-1), 1.0, atol=1e-5))

    print("KERNEL_OK")
</pallas_src>

<mosaic_0001>
module attributes {stable_mosaic.version = 11 : i64} {
  func.func @encoder_to_dirichlet_kernel(%arg0: i32, %arg1: memref<1x8x32xf32, #tpu.memory_space<vmem>>, %arg2: memref<32x16xf32, #tpu.memory_space<vmem>>, %arg3: memref<1x8x32xf32, #tpu.memory_space<vmem>>) attributes {dimension_semantics = [#tpu.dimension_semantics<parallel>], iteration_bounds = array<i64: 1>, scalar_prefetch = 0 : i64, scratch_operands = 0 : i64, tpu.core_type = #tpu.core_type<tc>, window_params = [{transform_indices = @transform_0, window_bounds = array<i64: 1, 8, 32>}, {pipeline_mode = #tpu.pipeline_mode<synchronous>, transform_indices = @transform_1, window_bounds = array<i64: 32, 16>}, {transform_indices = @transform_2, window_bounds = array<i64: 1, 8, 32>}]} {
    %c0 = arith.constant 0 : index
    %c0_0 = arith.constant 0 : index
    %c0_1 = arith.constant 0 : index
    %0 = vector.load %arg1[%c0, %c0_0, %c0_1] : memref<1x8x32xf32, #tpu.memory_space<vmem>>, vector<1x8x32xf32>
    %1 = vector.shape_cast %0 : vector<1x8x32xf32> to vector<8x32xf32>
    %c0_2 = arith.constant 0 : index
    %c0_3 = arith.constant 0 : index
    %2 = vector.load %arg2[%c0_2, %c0_3] : memref<32x16xf32, #tpu.memory_space<vmem>>, vector<32x16xf32>
    %cst = arith.constant dense<0.000000e+00> : vector<8x16xf32>
    %3 = tpu.matmul %1, %2, %cst {dimension_numbers = #tpu.dot_dimension_numbers<[1], [0], [0], [1], [0, 0, 1, 1], [], []>} : vector<8x32xf32>, vector<32x16xf32>, vector<8x16xf32> -> vector<8x16xf32>
    %cst_4 = arith.constant dense<0.000000e+00> : vector<16xf32>
    %4 = vector.multi_reduction <add>, %3, %cst_4 [0] : vector<8x16xf32> to vector<16xf32>
    %5 = vector.shape_cast %4 : vector<16xf32> to vector<1x16xf32>
    %cst_5 = arith.constant 8.000000e+00 : f32
    %6 = vector.broadcast %cst_5 : f32 to vector<1x16xf32>
    %7 = arith.divf %5, %6 : vector<1x16xf32>
    %8 = vector.broadcast %7 : vector<1x16xf32> to vector<8x16xf32>
    %9 = arith.subf %3, %8 : vector<8x16xf32>
    %10 = arith.mulf %9, %9 : vector<8x16xf32>
    %cst_6 = arith.constant dense<0.000000e+00> : vector<16xf32>
    %11 = vector.multi_reduction <add>, %10, %cst_6 [0] : vector<8x16xf32> to vector<16xf32>
    %12 = vector.shape_cast %11 : vector<16xf32> to vector<1x16xf32>
    %cst_7 = arith.constant 8.000000e+00 : f32
    %13 = vector.broadcast %cst_7 : f32 to vector<1x16xf32>
    %14 = arith.divf %12, %13 : vector<1x16xf32>
    %cst_8 = arith.constant 9.99999974E-6 : f32
    %15 = vector.broadcast %cst_8 : f32 to vector<1x16xf32>
    %16 = arith.addf %14, %15 : vector<1x16xf32>
    %17 = math.rsqrt %16 : vector<1x16xf32>
    %18 = vector.broadcast %17 : vector<1x16xf32> to vector<8x16xf32>
    %19 = arith.mulf %9, %18 : vector<8x16xf32>
    %20 = math.exp %19 : vector<8x16xf32>
    %cst_9 = arith.constant dense<0.000000e+00> : vector<8xf32>
    %21 = vector.multi_reduction <add>, %20, %cst_9 [1] : vector<8x16xf32> to vector<8xf32>
    %22 = vector.shape_cast %21 : vector<8xf32> to vector<8x1xf32>
    %23 = vector.broadcast %22 : vector<8x1xf32> to vector<8x16xf32>
    %24 = arith.divf %20, %23 : vector<8x16xf32>
    %25 = tpu.concatenate %20, %24 in 1 : vector<8x16xf32>, vector<8x16xf32> -> vector<8x32xf32>
    %c0_10 = arith.constant 0 : index
    %c0_11 = arith.constant 0 : index
    %c0_12 = arith.constant 0 : index
    %26 = vector.load %arg3[%c0_10, %c0_11, %c0_12] : memref<1x8x32xf32, #tpu.memory_space<vmem>>, vector<1x8x32xf32>
    %27 = vector.shape_cast %26 : vector<1x8x32xf32> to vector<8x32xf32>
    %28 = vector.shape_cast %25 : vector<8x32xf32> to vector<1x8x32xf32>
    tpu.vector_store %arg3[%c0_10, %c0_11, %c0_12], %28 {strides = array<i32>} : memref<1x8x32xf32, #tpu.memory_space<vmem>>, vector<1x8x32xf32>,
    return
  }
  func.func @transform_0(%arg0: i32) -> (i32, i32, i32) {
    %c0_i32 = arith.constant 0 : i32
    %c0_i32_0 = arith.constant 0 : i32
    %c0_i32_1 = arith.constant 0 : i32
    return %arg0, %c0_i32, %c0_i32_0 : i32, i32, i32
  }
  func.func @transform_1(%arg0: i32) -> (i32, i32) {
    %c0_i32 = arith.constant 0 : i32
    %c0_i32_0 = arith.constant 0 : i32
    %c0_i32_1 = arith.constant 0 : i32
    return %c0_i32, %c0_i32_0 : i32, i32
  }
  func.func @transform_2(%arg0: i32) -> (i32, i32, i32) {
    %c0_i32 = arith.constant 0 : i32
    %c0_i32_0 = arith.constant 0 : i32
    %c0_i32_1 = arith.constant 0 : i32
    return %arg0, %c0_i32, %c0_i32_0 : i32, i32, i32
  }
}

</mosaic_0001>

<llo_original>
// kernel: tpu_custom_call.1
$region0: #{tpu_custom_call.1}
  #allocation0 [shape = 'u32[]', space=smem, size = 0x4, offset = 0x4, fixed_abs, tag = 'smem constant byte address 0x4 - core index']
  #allocation1 [shape = 'u32[72,128]{1,0:T(1,128)}', space=vmem, size = 0x9000, scoped, tag = 'internal scratch']
  %s0 = inlined_call_operand.vmem [shape: f32[1,8,32], index: 0, kind: input, shape index: {}]
  %s1 = inlined_call_operand.vmem [shape: f32[32,16], index: 1, kind: input, shape index: {}]
  %s2 = inlined_call_operand.hbm [shape: f32[1,8,32], index: 2, kind: output, shape index: {}]
  %s3 = sld [smem:[#allocation0]]
  $region18: #{tpu_custom_call.1} parent=0
    _
  %s5 = ssub.s32 1, %s3
  %s6 = scalar_select 0, %s5, %s3
  $region1: #{tpu_custom_call.1} parent=0
    #allocation2 [shape = 'u8[4096]{0}', space=vmem, size = 0x1000, scoped, tag = 'output window, operand 0, single buffered']
    #allocation3 [shape = 's32[1]{0}', space=sflag, size = 0x4, scoped, tag = 'scoped memory for tpu_custom_call.1']
    %7 = vsyncpa [#allocation3], 0
    // Predicated region
    $region2: #{tpu_custom_call.1} parent=1 // pred_check
      _
    $region3: #{tpu_custom_call.1} parent=1 // pred_check_branch
      %9 = sbr.rel (0) target = $region5
    $region4: #{tpu_custom_call.1} parent=1 // pred_region
      _
    $region5: #{tpu_custom_call.1} parent=1 // pred_fallthru
      _
    // Predicated region
    $region6: #{tpu_custom_call.1} parent=1 // pred_check
      _
    $region7: #{tpu_custom_call.1} parent=1 // pred_check_branch
      %11 = sbr.rel (0) target = $region9
    $region8: #{tpu_custom_call.1} parent=1 // pred_region
      _
    $region9: #{tpu_custom_call.1} parent=1 // pred_fallthru
      _
    %v12 = vld [vmem:[%s0] sm:$0xff]
    %v13 = vld [vmem:[%s1] sm:$0xff]
    %v14 = vld [vmem:[%s1 + $0x8] sm:$0xff]
    %v15 = vld [vmem:[%s1 + $0x10] sm:$0xff]
    %v16 = vld [vmem:[%s1 + $0x18] sm:$0xff]
    %vm17 = vcmask 261120
    %v19 = vsel %vm17, %v12, 0
    %21 = vmatpush.msra.mxu0 0.0
    %22 = vmatpush.msra.mxu0 0.0
    %23 = vmatpush.msra.mxu0 0.0
    %24 = vmatpush.msra.mxu0 0.0
    %25 = vmatpush.msra.mxu0 0.0
    %26 = vmatpush.msra.mxu0 0.0
    %27 = vmatpush.msra.mxu0 0.0
    %28 = vmatpush.msra.mxu0 0.0
    %29 = vmatpush.msra.mxu0 0.0
    %30 = vmatpush.msra.mxu0 0.0
    %31 = vmatpush.msra.mxu0 0.0
    %32 = vmatpush.msra.mxu0 0.0
    %33 = vmatpush.msra.mxu0 %v16
    %34 = vmatpush.msra.mxu0 %v15
    %35 = vmatpush.msra.mxu0 %v14
    %36 = vmatpush.msra.mxu0 %v13
    %37 = vmatmul.f32.gmra.mxu0 %v19
    %v38 = vpop.f32.mrf.mxu0
    %v39 = vadd.f32 0.0, %v38
    %40 = vdwg.mxu0
    %vm41 = vcmask 130048
    %v42 = vsel %vm41, %v39, 0.0
    %v43 = vrot.slane %v42, 4
    %v44 = vadd.f32 %v42, %v43
    %v45 = vrot.slane %v44, 2
    %v46 = vadd.f32 %v44, %v45
    %v47 = vrot.slane %v46, 1
    %v48 = vadd.f32 %v46, %v47
    %v49 = vrcp.pop 8.0
    %v50 = vmul.f32 8.0, %v49
    %v51 = vsub.f32 1.0, %v50
    %v52 = vmul.f32 %v49, %v51
    %v53 = vadd.f32 %v49, %v52
    %vm54 = vweird.f32 %v49
    %v55 = vsel %vm54, %v49, %v53
    %v56 = vmul.f32 %v48, %v55
    %v57 = vsub.f32 %v39, %v56
    %v58 = vmul.f32 %v57, %v57
    %v59 = vsel %vm41, %v58, 0.0
    %v60 = vrot.slane %v59, 4
    %v61 = vadd.f32 %v59, %v60
    %v62 = vrot.slane %v61, 2
    %v63 = vadd.f32 %v61, %v62
    %v64 = vrot.slane %v63, 1
    %v65 = vadd.f32 %v63, %v64
    %v66 = vmul.f32 %v65, %v55
    %v67 = vadd.f32 %v66, 1e-05
    %v68 = vrsqrt.pop %v67
    %v69 = vmul.f32 %v68, %v67
    %v70 = vmul.f32 %v69, %v68
    %v71 = vmul.f32 0.5, %v70
    %v72 = vsub.f32 1.5, %v71
    %v73 = vmul.f32 %v68, %v72
    %vm74 = vweird.f32 %v67
    %vm75 = vweird.f32 %v68
    %vm76 = vmor %vm74, %vm75
    %v77 = vsel %vm76, %v68, %v73
    %v78 = vmul.f32 %v57, %v77
    %v79 = vmul.f32 %v78, 1.442695
    %v80 = vpow.pop %v79
    %v81 = vsel %vm41, %v80, 0.0
    %82 = vadd.xlane.f32.xlu0 %v81
    %v83 = vpop.xlane.xlu0 %82
    %v84 = vrcp.pop %v83
    %v85 = vmul.f32 %v83, %v84
    %v86 = vsub.f32 1.0, %v85
    %v87 = vmul.f32 %v84, %v86
    %v88 = vadd.f32 %v84, %v87
    %vm89 = vweird.f32 %v83
    %vm90 = vweird.f32 %v84
    %vm91 = vmor %vm89, %vm90
    %v92 = vsel %vm91, %v84, %v88
    %v93 = vand.u32 2147483647, %v83
    %vm94 = vcmp.eq.f32.partialorder %v93, 8.507059e+37
    %v95 = vand.u32 %v83, 2147483648
    %v96 = vor.u32 1.1754944e-38, %v95
    %v97 = vsel %vm94, %v96, %v92
    %v98 = vmul.f32 %v80, %v97
    %100 = vrot.lane.b32.xlu0 %v98, 16
    %v101 = vpop.permute.xlu0 %100
    %v103 = vsel %vm41, %v80, %v101
    %104 = vst.msk [vmem:[#allocation2] sm:$0xff] %vm17, %v103
    // Predicated region
    $region10: #{tpu_custom_call.1} parent=1 // pred_check
      _
    $region11: #{tpu_custom_call.1} parent=1 // pred_check_branch
      %106 = sbr.rel (0) target = $region13
    $region12: #{tpu_custom_call.1} parent=1 // pred_region
      %108 = vsyncadd [#allocation3], 0
      %s110 = sshll.u32 [#allocation2], 4
      %s111 = int_to_ptr.vmem [resolvable:$true] %s110
      %s112 = sshll.u32 %s2, 4
      %s113 = int_to_ptr.hbm [resolvable:$true] %s112
      %115 = dma.vmem_to_hbm [thread:$0]  %s111, 128, %s113, [#allocation3]
    $region13: #{tpu_custom_call.1} parent=1 // pred_fallthru
      _
    // Predicated region
    $region14: #{tpu_custom_call.1} parent=1 // pred_check
      _
    $region15: #{tpu_custom_call.1} parent=1 // pred_check_branch
      %117 = sbr.rel (0) target = $region17
    $region16: #{tpu_custom_call.1} parent=1 // pred_region
      %119 = dma.done [#allocation3], 128
    $region17: #{tpu_custom_call.1} parent=1 // pred_fallthru
      _
    %120 = vsyncpa [#allocation3], 1

</llo_original>
